<compile_context>
chip_gen: v5e
topology: v5e:2x2
jax: 0.10.0
libtpu: 0.0.40
codegen_flags: <defaults>
</compile_context>

<pallas_src>
import functools

import jax
import jax.numpy as jnp
from jax.experimental import pallas as pl
from jax.experimental.pallas import tpu as pltpu

LANES = 128


def _round_up(x, m):
    return ((x + m - 1) // m) * m


def _sublane_multiple(dtype):
    # f32 -> 8, bf16 -> 16, int8/fp8 -> 32 (sub-32-bit dtypes pack along sublanes).
    itemsize = jnp.dtype(dtype).itemsize
    return max(8, 32 // max(itemsize, 1))


def _device_config():
    """(max_block_rows, num_shards, use_core_parallel) per chip generation."""
    try:
        kind = jax.devices()[0].device_kind.lower()
    except Exception:  # pragma: no cover - defensive
        kind = ""
    if "v7" in kind:
        # 8192 rows = 4 MiB / input tile; x2 inputs x2 buffers = 16 MiB < 32 MiB scoped.
        return 8192, 2, True
    if "v6" in kind:
        # 4096 rows = 2 MiB / input tile; 8 MiB total with double buffering.
        return 4096, 1, False
    # v5e (16 MiB scoped VMEM default) and anything unknown: stay conservative.
    return 2048, 1, False


def _dice_kernel(p_ref, t_ref, out_ref, inter_acc, sum_acc, *,
                 n_rows, block_rows, blocks_per_shard, needs_mask):
    i = pl.program_id(1)  # reduction ("arbitrary") axis within this shard
    vregs = block_rows // 8

    @pl.when(i == 0)
    def _():
        inter_acc[...] = jnp.zeros_like(inter_acc)
        sum_acc[...] = jnp.zeros_like(sum_acc)

    p = p_ref[...].astype(jnp.float32)
    t = t_ref[...].astype(jnp.float32)

    def accumulate(pv, tv):
        # Per-step vreg-add tree down to one (8,128) partial; no cross-sublane
        # reduce here (that happens once in the epilogue).
        inter_acc[...] += jnp.sum((pv * tv).reshape(vregs, 8, LANES), axis=0)
        sum_acc[...] += jnp.sum((pv + tv).reshape(vregs, 8, LANES), axis=0)

    if needs_mask:
        s = pl.program_id(0)
        row_start = (s * blocks_per_shard + i) * block_rows
        is_tail = row_start + block_rows > n_rows

        # Full blocks: no masking work at all.
        @pl.when(jnp.logical_not(is_tail))
        def _():
            accumulate(p, t)

        # Ragged last block / phantom (clamped) blocks: mask rows past the end.
        @pl.when(is_tail)
        def _():
            row_ids = (
                jax.lax.broadcasted_iota(jnp.int32, (block_rows, LANES), 0)
                + row_start
            )
            valid = row_ids < n_rows
            accumulate(jnp.where(valid, p, 0.0), jnp.where(valid, t, 0.0))
    else:
        accumulate(p, t)

    @pl.when(i == pl.num_programs(1) - 1)
    def _():
        # Single cross-sublane reduction per shard, to lane-wide partials.
        out_ref[0, 0:1, :] = jnp.sum(inter_acc[...], axis=0, keepdims=True)
        out_ref[0, 1:2, :] = jnp.sum(sum_acc[...], axis=0, keepdims=True)


def dice_loss(preds, targets, smooth=1e-6):
    assert preds.shape == targets.shape
    smooth = float(smooth)

    max_block_rows, num_shards, core_parallel = _device_config()

    # Pass inputs through in their native dtype (bf16 etc.) -- the kernel
    # upcasts to f32 for accumulation; halving input bytes is a near-2x win
    # for this HBM-bound kernel.
    p_flat = jnp.reshape(preds, (-1,))
    t_flat = jnp.reshape(targets, (-1,))
    n = p_flat.shape[0]

    # Lane alignment: only pad (a copy) in the rare case n % 128 != 0.
    # TODO(synk): handle the sub-128 ragged tail without a jnp.pad copy.
    n_pad = _round_up(n, LANES)
    if n_pad != n:
        p_flat = jnp.pad(p_flat, (0, n_pad - n))
        t_flat = jnp.pad(t_flat, (0, n_pad - n))
    n_rows = n_pad // LANES

    sub = max(_sublane_multiple(preds.dtype), _sublane_multiple(targets.dtype))
    block_rows = min(max_block_rows, _round_up(n_rows, sub))
    total_blocks = pl.cdiv(n_rows, block_rows)
    if total_blocks < num_shards:
        num_shards, core_parallel = 1, False
    blocks_per_shard = pl.cdiv(total_blocks, num_shards)
    needs_mask = (total_blocks * block_rows != n_rows) or (
        num_shards * blocks_per_shard != total_blocks
    )

    p2d = jnp.reshape(p_flat, (n_rows, LANES))
    t2d = jnp.reshape(t_flat, (n_rows, LANES))

    kernel = functools.partial(
        _dice_kernel,
        n_rows=n_rows,
        block_rows=block_rows,
        blocks_per_shard=blocks_per_shard,
        needs_mask=needs_mask,
    )

    def in_map(s, i):
        # Clamp so phantom blocks (shard balancing) stay in bounds; their
        # contents are fully masked to zero inside the kernel.
        return (jnp.minimum(s * blocks_per_shard + i, total_blocks - 1), 0)

    if core_parallel and num_shards > 1:
        # Real 2-TensorCore split on v7x.
        dims = (pltpu.CORE_PARALLEL, pltpu.ARBITRARY)
    else:
        dims = (pltpu.ARBITRARY, pltpu.ARBITRARY)

    bytes_in = p2d.size * p2d.dtype.itemsize + t2d.size * t2d.dtype.itemsize
    cost = pl.CostEstimate(
        flops=3 * n_pad,
        transcendentals=0,
        bytes_accessed=bytes_in + num_shards * 2 * LANES * 4,
    )

    partials = pl.pallas_call(
        kernel,
        out_shape=jax.ShapeDtypeStruct((num_shards, 2, LANES), jnp.float32),
        grid_spec=pltpu.PrefetchScalarGridSpec(
            num_scalar_prefetch=0,
            grid=(num_shards, blocks_per_shard),
            in_specs=[
                pl.BlockSpec((block_rows, LANES), in_map),
                pl.BlockSpec((block_rows, LANES), in_map),
            ],
            out_specs=pl.BlockSpec((1, 2, LANES), lambda s, i: (s, 0, 0)),
            scratch_shapes=[
                pltpu.VMEM((8, LANES), jnp.float32),  # sum(p*t) partial
                pltpu.VMEM((8, LANES), jnp.float32),  # sum(p+t) partial
            ],
        ),
        compiler_params=pltpu.CompilerParams(dimension_semantics=dims),
        cost_estimate=cost,
    )(p2d, t2d)

    inter = jnp.sum(partials[:, 0, :])
    total = jnp.sum(partials[:, 1, :])
    dice = (2.0 * inter + smooth) / (total + smooth)
    return 1.0 - dice


def dice_loss_ref(preds, targets, smooth=1e-6):
    p = jnp.reshape(preds, (-1,)).astype(jnp.float32)
    t = jnp.reshape(targets, (-1,)).astype(jnp.float32)
    inter = jnp.sum(p * t)
    dice = (2.0 * inter + smooth) / (jnp.sum(p) + jnp.sum(t) + smooth)
    return 1.0 - dice


if __name__ == "__main__":
    key = jax.random.PRNGKey(0)
    k1, k2 = jax.random.split(key)
    # NCHW, as the PyTorch segmentation module would receive.
    shape = (2, 4, 16, 16)
    preds = jax.nn.sigmoid(jax.random.normal(k1, shape, dtype=jnp.float32))
    targets = (jax.random.uniform(k2, shape) > 0.5).astype(jnp.float32)

    loss = jax.block_until_ready(dice_loss(preds, targets))
    ref = jax.block_until_ready(dice_loss_ref(preds, targets))

    assert jnp.allclose(loss, ref, atol=1e-5, rtol=1e-5), (loss, ref)
    print("KERNEL_OK")
</pallas_src>

<mosaic_0001>
module attributes {stable_mosaic.version = 11 : i64} {
  func.func @_dice_kernel(%arg0: i32, %arg1: i32, %arg2: memref<16x128xf32, #tpu.memory_space<vmem>>, %arg3: memref<16x128xf32, #tpu.memory_space<vmem>>, %arg4: memref<1x2x128xf32, #tpu.memory_space<vmem>>, %arg5: memref<8x128xf32, #tpu.memory_space<vmem>>, %arg6: memref<8x128xf32, #tpu.memory_space<vmem>>) attributes {dimension_semantics = [#tpu.dimension_semantics<arbitrary>, #tpu.dimension_semantics<arbitrary>], iteration_bounds = array<i64: 1, 1>, scalar_prefetch = 0 : i64, scratch_operands = 2 : i64, tpu.core_type = #tpu.core_type<tc>, window_params = [{transform_indices = @transform_0, window_bounds = array<i64: 16, 128>}, {transform_indices = @transform_1, window_bounds = array<i64: 16, 128>}, {transform_indices = @transform_2, window_bounds = array<i64: 1, 2, 128>}]} {
    %c0_i32 = arith.constant 0 : i32
    %0 = arith.cmpi eq, %arg1, %c0_i32 : i32
    %1 = arith.extui %0 : i1 to i32
    %c0_i32_0 = arith.constant 0 : i32
    %2 = arith.cmpi ne, %1, %c0_i32_0 : i32
    scf.if %2 {
      %cst_15 = arith.constant 0.000000e+00 : f32
      %20 = vector.broadcast %cst_15 : f32 to vector<8x128xf32>
      %c0_16 = arith.constant 0 : index
      %c0_17 = arith.constant 0 : index
      %21 = vector.load %arg5[%c0_16, %c0_17] : memref<8x128xf32, #tpu.memory_space<vmem>>, vector<8x128xf32>
      tpu.vector_store %arg5[%c0_16, %c0_17], %20 {strides = array<i32>} : memref<8x128xf32, #tpu.memory_space<vmem>>, vector<8x128xf32>,
      %cst_18 = arith.constant 0.000000e+00 : f32
      %22 = vector.broadcast %cst_18 : f32 to vector<8x128xf32>
      %c0_19 = arith.constant 0 : index
      %c0_20 = arith.constant 0 : index
      %23 = vector.load %arg6[%c0_19, %c0_20] : memref<8x128xf32, #tpu.memory_space<vmem>>, vector<8x128xf32>
      tpu.vector_store %arg6[%c0_19, %c0_20], %22 {strides = array<i32>} : memref<8x128xf32, #tpu.memory_space<vmem>>, vector<8x128xf32>,
    } else {
    }
    %c0 = arith.constant 0 : index
    %c0_1 = arith.constant 0 : index
    %3 = vector.load %arg2[%c0, %c0_1] : memref<16x128xf32, #tpu.memory_space<vmem>>, vector<16x128xf32>
    %c0_2 = arith.constant 0 : index
    %c0_3 = arith.constant 0 : index
    %4 = vector.load %arg3[%c0_2, %c0_3] : memref<16x128xf32, #tpu.memory_space<vmem>>, vector<16x128xf32>
    %c0_4 = arith.constant 0 : index
    %c0_5 = arith.constant 0 : index
    %5 = vector.load %arg5[%c0_4, %c0_5] : memref<8x128xf32, #tpu.memory_space<vmem>>, vector<8x128xf32>
    %6 = arith.mulf %3, %4 : vector<16x128xf32>
    %7 = vector.shape_cast %6 : vector<16x128xf32> to vector<2x8x128xf32>
    %cst = arith.constant dense<0.000000e+00> : vector<8x128xf32>
    %8 = vector.multi_reduction <add>, %7, %cst [0] : vector<2x8x128xf32> to vector<8x128xf32>
    %9 = arith.addf %5, %8 : vector<8x128xf32>
    %c0_6 = arith.constant 0 : index
    %c0_7 = arith.constant 0 : index
    %10 = vector.load %arg5[%c0_6, %c0_7] : memref<8x128xf32, #tpu.memory_space<vmem>>, vector<8x128xf32>
    tpu.vector_store %arg5[%c0_6, %c0_7], %9 {strides = array<i32>} : memref<8x128xf32, #tpu.memory_space<vmem>>, vector<8x128xf32>,
    %c0_8 = arith.constant 0 : index
    %c0_9 = arith.constant 0 : index
    %11 = vector.load %arg6[%c0_8, %c0_9] : memref<8x128xf32, #tpu.memory_space<vmem>>, vector<8x128xf32>
    %12 = arith.addf %3, %4 : vector<16x128xf32>
    %13 = vector.shape_cast %12 : vector<16x128xf32> to vector<2x8x128xf32>
    %cst_10 = arith.constant dense<0.000000e+00> : vector<8x128xf32>
    %14 = vector.multi_reduction <add>, %13, %cst_10 [0] : vector<2x8x128xf32> to vector<8x128xf32>
    %15 = arith.addf %11, %14 : vector<8x128xf32>
    %c0_11 = arith.constant 0 : index
    %c0_12 = arith.constant 0 : index
    %16 = vector.load %arg6[%c0_11, %c0_12] : memref<8x128xf32, #tpu.memory_space<vmem>>, vector<8x128xf32>
    tpu.vector_store %arg6[%c0_11, %c0_12], %15 {strides = array<i32>} : memref<8x128xf32, #tpu.memory_space<vmem>>, vector<8x128xf32>,
    %c0_i32_13 = arith.constant 0 : i32
    %17 = arith.cmpi eq, %arg1, %c0_i32_13 : i32
    %18 = arith.extui %17 : i1 to i32
    %c0_i32_14 = arith.constant 0 : i32
    %19 = arith.cmpi ne, %18, %c0_i32_14 : i32
    scf.if %19 {
      %c0_15 = arith.constant 0 : index
      %c0_16 = arith.constant 0 : index
      %20 = vector.load %arg5[%c0_15, %c0_16] : memref<8x128xf32, #tpu.memory_space<vmem>>, vector<8x128xf32>
      %cst_17 = arith.constant dense<0.000000e+00> : vector<128xf32>
      %21 = vector.multi_reduction <add>, %20, %cst_17 [0] : vector<8x128xf32> to vector<128xf32>
      %22 = vector.shape_cast %21 : vector<128xf32> to vector<1x128xf32>
      %c0_18 = arith.constant 0 : index
      %c0_19 = arith.constant 0 : index
      %c0_20 = arith.constant 0 : index
      %23 = vector.load %arg4[%c0_18, %c0_19, %c0_20] : memref<1x2x128xf32, #tpu.memory_space<vmem>>, vector<1x1x128xf32>
      %24 = vector.shape_cast %23 : vector<1x1x128xf32> to vector<1x128xf32>
      %25 = vector.shape_cast %22 : vector<1x128xf32> to vector<1x1x128xf32>
      tpu.vector_store %arg4[%c0_18, %c0_19, %c0_20], %25 {strides = array<i32>} : memref<1x2x128xf32, #tpu.memory_space<vmem>>, vector<1x1x128xf32>,
      %c0_21 = arith.constant 0 : index
      %c0_22 = arith.constant 0 : index
      %26 = vector.load %arg6[%c0_21, %c0_22] : memref<8x128xf32, #tpu.memory_space<vmem>>, vector<8x128xf32>
      %cst_23 = arith.constant dense<0.000000e+00> : vector<128xf32>
      %27 = vector.multi_reduction <add>, %26, %cst_23 [0] : vector<8x128xf32> to vector<128xf32>
      %28 = vector.shape_cast %27 : vector<128xf32> to vector<1x128xf32>
      %c0_24 = arith.constant 0 : index
      %c1 = arith.constant 1 : index
      %c0_25 = arith.constant 0 : index
      %29 = vector.load %arg4[%c0_24, %c1, %c0_25] : memref<1x2x128xf32, #tpu.memory_space<vmem>>, vector<1x1x128xf32>
      %30 = vector.shape_cast %29 : vector<1x1x128xf32> to vector<1x128xf32>
      %31 = vector.shape_cast %28 : vector<1x128xf32> to vector<1x1x128xf32>
      tpu.vector_store %arg4[%c0_24, %c1, %c0_25], %31 {strides = array<i32>} : memref<1x2x128xf32, #tpu.memory_space<vmem>>, vector<1x1x128xf32>,
    } else {
    }
    return
  }
  func.func @transform_0(%arg0: i32, %arg1: i32) -> (i32, i32) {
    %c1_i32 = arith.constant 1 : i32
    %0 = arith.muli %arg0, %c1_i32 : i32
    %1 = arith.addi %0, %arg1 : i32
    %c0_i32 = arith.constant 0 : i32
    %2 = arith.minsi %1, %c0_i32 : i32
    %c0_i32_0 = arith.constant 0 : i32
    %c0_i32_1 = arith.constant 0 : i32
    return %2, %c0_i32_0 : i32, i32
  }
  func.func @transform_1(%arg0: i32, %arg1: i32) -> (i32, i32) {
    %c1_i32 = arith.constant 1 : i32
    %0 = arith.muli %arg0, %c1_i32 : i32
    %1 = arith.addi %0, %arg1 : i32
    %c0_i32 = arith.constant 0 : i32
    %2 = arith.minsi %1, %c0_i32 : i32
    %c0_i32_0 = arith.constant 0 : i32
    %c0_i32_1 = arith.constant 0 : i32
    return %2, %c0_i32_0 : i32, i32
  }
  func.func @transform_2(%arg0: i32, %arg1: i32) -> (i32, i32, i32) {
    %c0_i32 = arith.constant 0 : i32
    %c0_i32_0 = arith.constant 0 : i32
    %c0_i32_1 = arith.constant 0 : i32
    return %arg0, %c0_i32, %c0_i32_0 : i32, i32, i32
  }
}

</mosaic_0001>

<llo_original>
// kernel: tpu_custom_call.1
$region0: #{tpu_custom_call.1}
  #allocation0 [shape = 'u32[]', space=smem, size = 0x4, offset = 0x4, fixed_abs, tag = 'smem constant byte address 0x4 - core index']
  #allocation1 [shape = 'u32[72,128]{1,0:T(1,128)}', space=vmem, size = 0x9000, scoped, tag = 'internal scratch']
  #allocation2 [shape = 'f32[8,128]{1,0:T(8,128)}', space=vmem, size = 0x1000, scoped, tag = 'scratch operand']
  #allocation3 [shape = 'f32[8,128]{1,0:T(8,128)}', space=vmem, size = 0x1000, scoped, tag = 'scratch operand']
  %s0 = inlined_call_operand.hbm [shape: f32[16,128], index: 0, kind: input, shape index: {}]
  %s1 = inlined_call_operand.hbm [shape: f32[16,128], index: 1, kind: input, shape index: {}]
  %s2 = inlined_call_operand.hbm [shape: f32[1,2,128], index: 2, kind: output, shape index: {}]
  %s3 = sld [smem:[#allocation0]]
  $region34: #{tpu_custom_call.1} parent=0
    _
  %s5 = ssub.s32 1, %s3
  %s6 = scalar_select 0, %s5, %s3
  $region1: #{tpu_custom_call.1} parent=0
    #allocation4 [shape = 'u8[8192]{0}', space=vmem, size = 0x2000, scoped, tag = 'input window, operand 0, single buffered']
    #allocation5 [shape = 's32[1]{0}', space=sflag, size = 0x4, scoped, tag = 'scoped memory for tpu_custom_call.1']
    #allocation6 [shape = 's32[1]{0}', space=sflag, size = 0x4, scoped, tag = 'scoped memory for tpu_custom_call.1']
    #allocation7 [shape = 'u8[8192]{0}', space=vmem, size = 0x2000, scoped, tag = 'input window, operand 1, single buffered']
    #allocation8 [shape = 's32[1]{0}', space=sflag, size = 0x4, scoped, tag = 'scoped memory for tpu_custom_call.1']
    #allocation9 [shape = 'u8[1024]{0}', space=vmem, size = 0x400, scoped, tag = 'output window, operand 0, single buffered']
    %7 = vsyncpa [#allocation5], 0
    %8 = vsyncpa [#allocation8], 0
    %9 = vsyncpa [#allocation6], 0
    // Predicated region
    $region2: #{tpu_custom_call.1} parent=1 // pred_check
      _
    $region3: #{tpu_custom_call.1} parent=1 // pred_check_branch
      %11 = sbr.rel (0) target = $region5
    $region4: #{tpu_custom_call.1} parent=1 // pred_region
      %s12 = sadd.s32 0, 0
      %p13 = scmp.lt.s32.totalorder %s12, 0
      %s14 = scalar_select %p13, %s12, 0
      %s15 = smul.u32 2, %s14
      %17 = vsyncadd [#allocation5], 0
      %s18 = smul.addr %s15, 8
      %s19 = scalar_lea.hbm %s0, %s18
      %s20 = sshll.u32 %s19, 4
      %s21 = int_to_ptr.hbm [resolvable:$true] %s20
      %s22 = sshll.u32 [#allocation4], 4
      %s23 = int_to_ptr.vmem [resolvable:$true] %s22
      %28 = dma.hbm_to_vmem [thread:$0]  %s21, 256, %s23, [#allocation5], 128, 128, 8
    $region5: #{tpu_custom_call.1} parent=1 // pred_fallthru
      _
    // Predicated region
    $region6: #{tpu_custom_call.1} parent=1 // pred_check
      _
    $region7: #{tpu_custom_call.1} parent=1 // pred_check_branch
      %30 = sbr.rel (0) target = $region9
    $region8: #{tpu_custom_call.1} parent=1 // pred_region
      %s31 = sadd.s32 0, 0
      %p32 = scmp.lt.s32.totalorder %s31, 0
      %s33 = scalar_select %p32, %s31, 0
      %s34 = smul.u32 2, %s33
      %36 = vsyncadd [#allocation8], 0
      %s37 = smul.addr %s34, 8
      %s38 = scalar_lea.hbm %s1, %s37
      %s39 = sshll.u32 %s38, 4
      %s40 = int_to_ptr.hbm [resolvable:$true] %s39
      %s41 = sshll.u32 [#allocation7], 4
      %s42 = int_to_ptr.vmem [resolvable:$true] %s41
      %47 = dma.hbm_to_vmem [thread:$0]  %s40, 256, %s42, [#allocation8], 128, 128, 8
    $region9: #{tpu_custom_call.1} parent=1 // pred_fallthru
      _
    // Predicated region
    $region10: #{tpu_custom_call.1} parent=1 // pred_check
      _
    $region11: #{tpu_custom_call.1} parent=1 // pred_check_branch
      %49 = sbr.rel (0) target = $region13
    $region12: #{tpu_custom_call.1} parent=1 // pred_region
      %51 = dma.done [#allocation5], 256
    $region13: #{tpu_custom_call.1} parent=1 // pred_fallthru
      _
    // Predicated region
    $region14: #{tpu_custom_call.1} parent=1 // pred_check
      _
    $region15: #{tpu_custom_call.1} parent=1 // pred_check_branch
      %53 = sbr.rel (0) target = $region17
    $region16: #{tpu_custom_call.1} parent=1 // pred_region
      %55 = dma.done [#allocation8], 256
    $region17: #{tpu_custom_call.1} parent=1 // pred_fallthru
      _
    %s56 = sadd.s32 0, 0
    %p57 = scmp.lt.s32.totalorder %s56, 0
    %s58 = scalar_select %p57, %s56, 0
    %s59 = smul.u32 2, %s58
    %s60 = sadd.s32 0, 0
    %p61 = scmp.lt.s32.totalorder %s60, 0
    %s62 = scalar_select %p61, %s60, 0
    %s63 = smul.u32 2, %s62
    %p64 = scmp.eq.s32.totalorder 0, 0
    // Predicated region
    $region18: #{tpu_custom_call.1} parent=1 // pred_check
      %p65 = pneg %p64
    $region19: #{tpu_custom_call.1} parent=1 // pred_check_branch
      %67 = sbr.rel (%p65) target = $region21
    $region20: #{tpu_custom_call.1} parent=1 // pred_region
      %68 = vst [vmem:[#allocation2] sm:$0xff] 0.0
      %69 = vst [vmem:[#allocation3] sm:$0xff] 0.0
    $region21: #{tpu_custom_call.1} parent=1 // pred_fallthru
      _
    %v70 = vld [vmem:[#allocation4] sm:$0xff]
    %v71 = vld [vmem:[#allocation4 + $0x8] sm:$0xff]
    %v72 = vld [vmem:[#allocation7] sm:$0xff]
    %v73 = vld [vmem:[#allocation7 + $0x8] sm:$0xff]
    %v74 = vld [vmem:[#allocation2] sm:$0xff]
    %v75 = vmul.f32 %v70, %v72
    %v76 = vmul.f32 %v71, %v73
    %v77 = vadd.f32 %v75, %v76
    %v78 = vadd.f32 %v74, %v77
    %79 = vst [vmem:[#allocation2] sm:$0xff] %v78
    %v80 = vld [vmem:[#allocation3] sm:$0xff]
    %v81 = vadd.f32 %v70, %v72
    %v82 = vadd.f32 %v71, %v73
    %v83 = vadd.f32 %v81, %v82
    %v84 = vadd.f32 %v80, %v83
    %85 = vst [vmem:[#allocation3] sm:$0xff] %v84
    // Predicated region
    $region22: #{tpu_custom_call.1} parent=1 // pred_check
      %p86 = pneg %p64
    $region23: #{tpu_custom_call.1} parent=1 // pred_check_branch
      %88 = sbr.rel (%p86) target = $region25
    $region24: #{tpu_custom_call.1} parent=1 // pred_region
      %v89 = vld [vmem:[#allocation2] sm:$0xff]
      %v90 = vrot.slane %v89, 4
      %v91 = vadd.f32 %v89, %v90
      %v92 = vrot.slane %v91, 2
      %v93 = vadd.f32 %v91, %v92
      %v94 = vrot.slane %v93, 1
      %v95 = vadd.f32 %v93, %v94
      %96 = vst [vmem:[#allocation9] sm:$0x1] %v95
      %v97 = vld [vmem:[#allocation3] sm:$0xff]
      %v98 = vrot.slane %v97, 4
      %v99 = vadd.f32 %v97, %v98
      %v100 = vrot.slane %v99, 2
      %v101 = vadd.f32 %v99, %v100
      %v102 = vrot.slane %v101, 1
      %v103 = vadd.f32 %v101, %v102
      %104 = vst [vmem:[#allocation9 + $0x1] sm:$0x1] %v103
    $region25: #{tpu_custom_call.1} parent=1 // pred_fallthru
      _
    // Predicated region
    $region26: #{tpu_custom_call.1} parent=1 // pred_check
      _
    $region27: #{tpu_custom_call.1} parent=1 // pred_check_branch
      %106 = sbr.rel (0) target = $region29
    $region28: #{tpu_custom_call.1} parent=1 // pred_region
      %108 = vsyncadd [#allocation6], 0
      %s110 = sshll.u32 [#allocation9], 4
      %s111 = int_to_ptr.vmem [resolvable:$true] %s110
      %s112 = sshll.u32 %s2, 4
      %s113 = int_to_ptr.hbm [resolvable:$true] %s112
      %115 = dma.vmem_to_hbm [thread:$0]  %s111, 32, %s113, [#allocation6]
    $region29: #{tpu_custom_call.1} parent=1 // pred_fallthru
      _
    // Predicated region
    $region30: #{tpu_custom_call.1} parent=1 // pred_check
      _
    $region31: #{tpu_custom_call.1} parent=1 // pred_check_branch
      %117 = sbr.rel (0) target = $region33
    $region32: #{tpu_custom_call.1} parent=1 // pred_region
      %119 = dma.done [#allocation6], 32
    $region33: #{tpu_custom_call.1} parent=1 // pred_fallthru
      _
    %120 = vsyncpa [#allocation5], 1
    %121 = vsyncpa [#allocation8], 1
    %122 = vsyncpa [#allocation6], 1

</llo_original>
